<compile_context>
chip_gen: v7x
topology: tpu7x:2x2x1
jax: 0.10.0
libtpu: 0.0.40
codegen_flags: <defaults>
</compile_context>

<pallas_src>
import functools

import jax
import jax.numpy as jnp
from jax.experimental import pallas as pl
from jax.experimental.pallas import tpu as pltpu


def _wlp_kernel_f32(w_ref, x_ref, o_ref):
    """f32 in/out: accumulate directly into the resident output block."""
    l = pl.program_id(2)

    @pl.when(l == 0)
    def _():
        o_ref[...] = w_ref[0] * x_ref[...]

    @pl.when(l > 0)
    def _():
        o_ref[...] += w_ref[l] * x_ref[...]


def _wlp_kernel_acc(w_ref, x_ref, o_ref, acc_ref, *, num_layers):
    """Narrow in/out dtype: accumulate in f32 VMEM scratch, cast on finalize."""
    l = pl.program_id(2)

    @pl.when(l == 0)
    def _():
        acc_ref[...] = w_ref[0] * x_ref[...].astype(jnp.float32)

    @pl.when(l > 0)
    def _():
        acc_ref[...] += w_ref[l] * x_ref[...].astype(jnp.float32)

    @pl.when(l == num_layers - 1)
    def _():
        o_ref[...] = acc_ref[...].astype(o_ref.dtype)


def weighted_layer_pooling(all_hidden_states, layer_weights, *, layer_start=4,
                           block_tokens=1024, vmem_budget_bytes=24 << 20):
    """all_hidden_states: [L+1, B, S, H]; layer_weights: [L+1-layer_start].

    Returns the weighted layer average, shape [B, S, H], in the input dtype.
    """
    n_states, B, S, H = all_hidden_states.shape
    num_layers = n_states - layer_start
    assert num_layers >= 1, (n_states, layer_start)
    assert layer_weights.shape == (num_layers,), (layer_weights.shape, num_layers)

    dtype = all_hidden_states.dtype
    # Tiny vector: normalize in the wrapper so the kernel never divides.
    w = layer_weights.astype(jnp.float32)
    w = w / jnp.sum(w)

    T = B * S
    # Free contiguous reshape of the FULL stack; the layer_start offset lives
    # in the index_map below (no sliced copy through HBM).
    x = all_hidden_states.reshape(n_states, T, H)

    itemsize = jnp.dtype(dtype).itemsize
    sub = max(8, 32 // itemsize)          # dtype-native sublane multiple

    # Lane-axis tile: full H unless very wide (keep token tiles big instead).
    if H >= 4096 and H % 128 == 0:
        th = 2048
    else:
        th = H
    num_h_tiles = pl.cdiv(H, th)

    f32_out = dtype == jnp.float32
    acc_bytes = 0 if f32_out else 4
    # Double-buffered input + double-buffered output + (optional) f32 acc.
    per_row = th * (2 * itemsize + 2 * itemsize + acc_bytes)
    tt = min(block_tokens, max(sub, (vmem_budget_bytes // per_row) // sub * sub))
    tt = max(sub, (tt // sub) * sub)
    if tt >= T:
        tt = T                            # single full-dim block is always legal
    num_t_tiles = pl.cdiv(T, tt)

    footprint = tt * th * (4 * itemsize + acc_bytes)
    vmem_limit = min(max(footprint + (8 << 20), 32 << 20), 48 << 20)

    if f32_out:
        kernel = _wlp_kernel_f32
        scratch_shapes = []
    else:
        kernel = functools.partial(_wlp_kernel_acc, num_layers=num_layers)
        scratch_shapes = [pltpu.VMEM((tt, th), jnp.float32)]

    out = pl.pallas_call(
        kernel,
        out_shape=jax.ShapeDtypeStruct((T, H), dtype),
        grid=(num_t_tiles, num_h_tiles, num_layers),
        in_specs=[
            # Learnable layer weights: whole (small) vector in SMEM.
            pl.BlockSpec(memory_space=pltpu.MemorySpace.SMEM),
            # One [tt, th] slab of layer (l + layer_start) per step
            # (leading layer dim squeezed out of the kernel view).
            pl.BlockSpec((None, tt, th),
                         lambda t, h, l: (l + layer_start, t, h)),
        ],
        out_specs=pl.BlockSpec((tt, th), lambda t, h, l: (t, h)),
        scratch_shapes=scratch_shapes,
        compiler_params=pltpu.CompilerParams(
            dimension_semantics=("parallel", "parallel", "arbitrary"),
            vmem_limit_bytes=vmem_limit),
    )(w, x)

    return out.reshape(B, S, H)


def _reference(all_hidden_states, layer_weights, layer_start=4):
    """Pure-JAX mirror of the PyTorch module (f32 math)."""
    emb = all_hidden_states[layer_start:].astype(jnp.float32)
    wf = layer_weights.reshape(-1, 1, 1, 1).astype(jnp.float32)
    return (wf * emb).sum(axis=0) / jnp.sum(layer_weights.astype(jnp.float32))


if __name__ == "__main__":
    num_hidden_layers = 12
    layer_start = 4
    n_states = num_hidden_layers + 1                     # 13 hidden-state maps

    key = jax.random.PRNGKey(0)
    k1, k2, k3 = jax.random.split(key, 3)

    # --- test 1: f32, accumulate-into-output path, single token tile
    B, S, H = 2, 8, 32
    hs = jax.random.normal(k1, (n_states, B, S, H), dtype=jnp.float32)
    w = jax.random.uniform(k2, (n_states - layer_start,), dtype=jnp.float32,
                           minval=0.5, maxval=1.5)
    out = weighted_layer_pooling(hs, w, layer_start=layer_start)
    jax.block_until_ready(out)
    ref = _reference(hs, w, layer_start)
    assert out.shape == (B, S, H), out.shape
    assert jnp.allclose(out, ref, atol=1e-5, rtol=1e-5), (
        float(jnp.max(jnp.abs(out - ref))))

    # --- test 2: partial last token tile (T=20, tt=8) with no wrapper padding
    B2, S2, H2 = 4, 5, 32
    hs2 = jax.random.normal(k3, (n_states, B2, S2, H2), dtype=jnp.float32)
    out2 = weighted_layer_pooling(hs2, w, layer_start=layer_start,
                                  block_tokens=8)
    jax.block_until_ready(out2)
    ref2 = _reference(hs2, w, layer_start)
    assert jnp.allclose(out2, ref2, atol=1e-5, rtol=1e-5), (
        float(jnp.max(jnp.abs(out2 - ref2))))

    # --- test 3: bf16 hidden states (f32 scratch accumulator path)
    hs3 = hs.astype(jnp.bfloat16)
    out3 = weighted_layer_pooling(hs3, w, layer_start=layer_start)
    jax.block_until_ready(out3)
    ref3 = _reference(hs3, w, layer_start)
    assert out3.dtype == jnp.bfloat16
    assert jnp.allclose(out3.astype(jnp.float32), ref3, atol=3e-2, rtol=3e-2), (
        float(jnp.max(jnp.abs(out3.astype(jnp.float32) - ref3))))

    print("KERNEL_OK")
</pallas_src>

<mosaic_0001>
module attributes {stable_mosaic.version = 11 : i64} {
  func.func @_wlp_kernel_f32(%arg0: i32, %arg1: i32, %arg2: i32, %arg3: memref<9xf32, #tpu.memory_space<smem>>, %arg4: memref<1x16x32xf32, #tpu.memory_space<vmem>>, %arg5: memref<16x32xf32, #tpu.memory_space<vmem>>) attributes {dimension_semantics = [#tpu.dimension_semantics<parallel>, #tpu.dimension_semantics<parallel>, #tpu.dimension_semantics<arbitrary>], iteration_bounds = array<i64: 1, 1, 9>, scalar_prefetch = 0 : i64, scratch_operands = 0 : i64, tpu.core_type = #tpu.core_type<tc>, window_params = [{transform_indices = @transform_0, window_bounds = array<i64: 9>}, {transform_indices = @transform_1, window_bounds = array<i64: 1, 16, 32>}, {transform_indices = @transform_2, window_bounds = array<i64: 16, 32>}]} {
    %c0_i32 = arith.constant 0 : i32
    %0 = arith.cmpi eq, %arg2, %c0_i32 : i32
    %1 = arith.extui %0 : i1 to i32
    %c0_i32_0 = arith.constant 0 : i32
    %2 = arith.cmpi ne, %1, %c0_i32_0 : i32
    scf.if %2 {
      %c0 = arith.constant 0 : index
      %6 = memref.load %arg3[%c0] : memref<9xf32, #tpu.memory_space<smem>>
      %c0_3 = arith.constant 0 : index
      %c0_4 = arith.constant 0 : index
      %c0_5 = arith.constant 0 : index
      %7 = vector.load %arg4[%c0_3, %c0_4, %c0_5] : memref<1x16x32xf32, #tpu.memory_space<vmem>>, vector<1x16x32xf32>
      %8 = vector.shape_cast %7 : vector<1x16x32xf32> to vector<16x32xf32>
      %9 = vector.broadcast %6 : f32 to vector<16x32xf32>
      %10 = arith.mulf %9, %8 : vector<16x32xf32>
      %c0_6 = arith.constant 0 : index
      %c0_7 = arith.constant 0 : index
      %11 = vector.load %arg5[%c0_6, %c0_7] : memref<16x32xf32, #tpu.memory_space<vmem>>, vector<16x32xf32>
      tpu.vector_store %arg5[%c0_6, %c0_7], %10 {strides = array<i32>} : memref<16x32xf32, #tpu.memory_space<vmem>>, vector<16x32xf32>,
    } else {
    }
    %c0_i32_1 = arith.constant 0 : i32
    %3 = arith.cmpi sgt, %arg2, %c0_i32_1 : i32
    %4 = arith.extui %3 : i1 to i32
    %c0_i32_2 = arith.constant 0 : i32
    %5 = arith.cmpi ne, %4, %c0_i32_2 : i32
    scf.if %5 {
      %c0 = arith.constant 0 : index
      %c0_3 = arith.constant 0 : index
      %6 = vector.load %arg5[%c0, %c0_3] : memref<16x32xf32, #tpu.memory_space<vmem>>, vector<16x32xf32>
      %7 = arith.index_cast %arg2 : i32 to index
      %8 = memref.load %arg3[%7] : memref<9xf32, #tpu.memory_space<smem>>
      %c0_4 = arith.constant 0 : index
      %c0_5 = arith.constant 0 : index
      %c0_6 = arith.constant 0 : index
      %9 = vector.load %arg4[%c0_4, %c0_5, %c0_6] : memref<1x16x32xf32, #tpu.memory_space<vmem>>, vector<1x16x32xf32>
      %10 = vector.shape_cast %9 : vector<1x16x32xf32> to vector<16x32xf32>
      %11 = vector.broadcast %8 : f32 to vector<16x32xf32>
      %12 = arith.mulf %11, %10 : vector<16x32xf32>
      %13 = arith.addf %6, %12 : vector<16x32xf32>
      %c0_7 = arith.constant 0 : index
      %c0_8 = arith.constant 0 : index
      %14 = vector.load %arg5[%c0_7, %c0_8] : memref<16x32xf32, #tpu.memory_space<vmem>>, vector<16x32xf32>
      tpu.vector_store %arg5[%c0_7, %c0_8], %13 {strides = array<i32>} : memref<16x32xf32, #tpu.memory_space<vmem>>, vector<16x32xf32>,
    } else {
    }
    return
  }
  func.func @transform_0(%arg0: i32, %arg1: i32, %arg2: i32) -> i32 {
    %c0_i32 = arith.constant 0 : i32
    %c0_i32_0 = arith.constant 0 : i32
    return %c0_i32 : i32
  }
  func.func @transform_1(%arg0: i32, %arg1: i32, %arg2: i32) -> (i32, i32, i32) {
    %c4_i32 = arith.constant 4 : i32
    %0 = arith.addi %arg2, %c4_i32 : i32
    %c0_i32 = arith.constant 0 : i32
    return %0, %arg0, %arg1 : i32, i32, i32
  }
  func.func @transform_2(%arg0: i32, %arg1: i32, %arg2: i32) -> (i32, i32) {
    %c0_i32 = arith.constant 0 : i32
    return %arg0, %arg1 : i32, i32
  }
}

</mosaic_0001>

<llo_original>
// kernel: tpu_custom_call.1
$region0: #{tpu_custom_call.1}
  #allocation0 [shape = 'u32[]', space=smem, size = 0x4, offset = 0x4, fixed_abs, tag = 'smem constant byte address 0x4 - core index']
  #allocation1 [shape = 'u32[144,128]{1,0:T(1,128)}', space=vmem, size = 0x12000, scoped, tag = 'internal scratch']
  %s0 = inlined_call_operand.hbm [shape: f32[9], index: 0, kind: input, shape index: {}]
  %s1 = inlined_call_operand.hbm [shape: f32[13,16,32], index: 1, kind: input, shape index: {}]
  %s2 = inlined_call_operand.hbm [shape: f32[16,32], index: 2, kind: output, shape index: {}]
  %s3 = sld [smem:[#allocation0]]
  $region57: #{tpu_custom_call.1} parent=0
    _
  %s5 = ssub.s32 1, %s3
  %s6 = scalar_select 0, %s5, %s3
  $region1: #{tpu_custom_call.1} parent=0
    #allocation2 [shape = 'u8[512]{0}', space=smem, size = 0x200, scoped, tag = 'input window, operand 0, single buffered']
    #allocation3 [shape = 's32[2]{0}', space=sflag, size = 0x8, scoped, tag = 'scoped memory for tpu_custom_call.1']
    #allocation4 [shape = 's32[2]{0}', space=sflag, size = 0x8, scoped, tag = 'scoped memory for tpu_custom_call.1']
    #allocation5 [shape = 's32[2]{0}', space=sflag, size = 0x8, scoped, tag = 'scoped memory for tpu_custom_call.1']
    #allocation6 [shape = 'u8[16384]{0}', space=vmem, size = 0x4000, scoped, tag = 'input window, operand 1']
    #allocation7 [shape = 'u8[8192]{0}', space=vmem, size = 0x2000, scoped, tag = 'output window, operand 0, single buffered']
    %7 = vsyncpa [#allocation5], 0
    %8 = vsyncpa [#allocation3], 0
    %s9 = scalar_lea.sflag [#allocation3], 1
    %10 = vsyncpa %s9, 0
    %11 = vsyncpa [#allocation4], 0
    loop: start=0, step=1, limit=11
    $region2: #{tpu_custom_call.1} parent=1 // loop_pre_header
      _
    $region3: #{tpu_custom_call.1} parent=1 // loop_header
      %s13 = sphi 0, %s17
      %p14 = scmp.ge.s32.totalorder %s13, 11
      %s20 = sphi 0, %s39
      %s21 = sphi 0, %s35
      %s22 = sphi 0, %s31
      %s23 = sphi 0, %s20
      %s24 = sphi 0, %s21
      %s25 = sphi 0, %s22
      %s26 = sphi 0, %s23
      %s27 = sphi 0, %s24
      %s28 = sphi 0, %s25
      %s40 = sphi 0, %s40
      %s42 = sphi 0, %s40
      %s43 = sphi 0, %s42
      %s57 = sphi 0, %s43
      %s69 = sphi 0, %s71
      %s72 = sphi 0, %s69
      %s73 = sphi 0, %s72
      %s89 = sphi 0, %s73
      %s97 = sphi 0, %s99
      %s100 = sphi 0, %s97
      %s101 = sphi 0, %s100
      %s117 = sphi 0, %s101
    $region4: #{tpu_custom_call.1} parent=1 // loop_header_branch
      %16 = sbr.rel (%p14) target = $region8
    $region5: #{tpu_custom_call.1} parent=1 // loop_body
      %s18 = ssub.s32 %s13, 1
      %s19 = ssub.s32 %s13, 2
      %s29 = sadd.s32 1, %s22
      %p30 = scmp.ge.s32.totalorder %s29, 9
      %s31 = scalar_select %p30, 0, %s29
      %s32 = sadd.s32 1, %s21
      %s33 = scalar_select %p30, %s32, %s21
      %p34 = scmp.ge.s32.totalorder %s33, 1
      %s35 = scalar_select %p34, 0, %s33
      %s36 = sadd.s32 1, %s20
      %s37 = scalar_select %p34, %s36, %s20
      %p38 = scmp.ge.s32.totalorder %s37, 1
      %s39 = scalar_select %p38, 0, %s37
      %s41 = sadd.s32 %s40, 1
      %p44 = scmp.eq.s32.totalorder %s13, 8
      %p45 = scmp.ne.s32.totalorder %s40, %s42
      %p46 = scmp.eq.s32.totalorder %s13, 0
      %p47 = por %p45, %p46
      %p48 = scmp.ne.s32.totalorder %s40, %s42
      %p49 = scmp.eq.s32.totalorder %s18, 8
      %p50 = por %p48, %p49
      %p51 = scmp.ne.s32.totalorder %s42, %s43
      %p52 = scmp.eq.s32.totalorder %s18, 0
      %p53 = por %p51, %p52
      %p54 = scmp.ne.s32.totalorder %s42, %s43
      %p55 = scmp.eq.s32.totalorder %s19, 8
      %p56 = por %p54, %p55
      %p58 = scmp.ne.s32.totalorder %s43, %s57
      %p59 = scmp.eq.s32.totalorder %s19, 0
      %p60 = por %p58, %p59
      %s61 = sadd.s32 %s22, 4
      %s62 = sadd.s32 %s31, 4
      %s63 = ssub.s32 %s61, %s62
      %s64 = ssub.s32 %s20, %s39
      %s65 = sor.u32 %s63, %s64
      %s66 = ssub.s32 %s21, %s35
      %s67 = sor.u32 %s65, %s66
      %p68 = scmp.eq.s32.totalorder %s67, 0
      %s70 = sadd.s32 %s69, 1
      %s71 = scalar_select %p68, %s69, %s70
      %p74 = pneg %p68
      %p75 = scmp.eq.s32.totalorder %s13, 8
      %p76 = por %p74, %p75
      %p77 = scmp.ne.s32.totalorder %s69, %s72
      %p78 = scmp.eq.s32.totalorder %s13, 0
      %p79 = por %p77, %p78
      %p80 = scmp.ne.s32.totalorder %s69, %s72
      %p81 = scmp.eq.s32.totalorder %s18, 8
      %p82 = por %p80, %p81
      %p83 = scmp.ne.s32.totalorder %s72, %s73
      %p84 = scmp.eq.s32.totalorder %s18, 0
      %p85 = por %p83, %p84
      %p86 = scmp.ne.s32.totalorder %s72, %s73
      %p87 = scmp.eq.s32.totalorder %s19, 8
      %p88 = por %p86, %p87
      %p90 = scmp.ne.s32.totalorder %s73, %s89
      %p91 = scmp.eq.s32.totalorder %s19, 0
      %p92 = por %p90, %p91
      %s93 = ssub.s32 %s20, %s39
      %s94 = ssub.s32 %s21, %s35
      %s95 = sor.u32 %s93, %s94
      %p96 = scmp.eq.s32.totalorder %s95, 0
      %s98 = sadd.s32 %s97, 1
      %s99 = scalar_select %p96, %s97, %s98
      %p102 = pneg %p96
      %p103 = scmp.eq.s32.totalorder %s13, 8
      %p104 = por %p102, %p103
      %p105 = scmp.ne.s32.totalorder %s97, %s100
      %p106 = scmp.eq.s32.totalorder %s13, 0
      %p107 = por %p105, %p106
      %p108 = scmp.ne.s32.totalorder %s97, %s100
      %p109 = scmp.eq.s32.totalorder %s18, 8
      %p110 = por %p108, %p109
      %p111 = scmp.ne.s32.totalorder %s100, %s101
      %p112 = scmp.eq.s32.totalorder %s18, 0
      %p113 = por %p111, %p112
      %p114 = scmp.ne.s32.totalorder %s100, %s101
      %p115 = scmp.eq.s32.totalorder %s19, 8
      %p116 = por %p114, %p115
      %p118 = scmp.ne.s32.totalorder %s101, %s117
      %p119 = scmp.eq.s32.totalorder %s19, 0
      %p120 = por %p118, %p119
      %p121 = scmp.le.s32.totalorder 1, %s13
      %p122 = scmp.lt.s32.totalorder %s13, 10
      %p123 = pnand %p121, %p122
      %p124 = pneg %p123
      // Predicated region
      $region9: #{tpu_custom_call.1} parent=5 // pred_check
        _
      $region10: #{tpu_custom_call.1} parent=5 // pred_check_branch
        %126 = sbr.rel (%p123) target = $region12
      $region11: #{tpu_custom_call.1} parent=5 // pred_region
        %s127 = ssub.s32 %s13, 1
        // Predicated region
        $region13: #{tpu_custom_call.1} parent=11 // pred_check
          %p128 = pneg %p53
        $region14: #{tpu_custom_call.1} parent=11 // pred_check_branch
          %130 = sbr.rel (%p128) target = $region16
        $region15: #{tpu_custom_call.1} parent=11 // pred_region
          %s132 = ssub.s32 16, 16
          %133 = vsyncadd [#allocation5], %s132
          %136 = dma.hbm_to_smem %s0, 16, [#allocation2], [#allocation5]
        $region16: #{tpu_custom_call.1} parent=11 // pred_fallthru
          _
      $region12: #{tpu_custom_call.1} parent=5 // pred_fallthru
        _
      %p137 = scmp.lt.s32.totalorder %s13, 9
      // Predicated region
      $region17: #{tpu_custom_call.1} parent=5 // pred_check
        %p138 = pneg %p137
      $region18: #{tpu_custom_call.1} parent=5 // pred_check_branch
        %140 = sbr.rel (%p138) target = $region20
      $region19: #{tpu_custom_call.1} parent=5 // pred_region
        // Predicated region
        $region21: #{tpu_custom_call.1} parent=19 // pred_check
          %p141 = pneg %p79
        $region22: #{tpu_custom_call.1} parent=19 // pred_check_branch
          %143 = sbr.rel (%p141) target = $region24
        $region23: #{tpu_custom_call.1} parent=19 // pred_region
          %s144 = sand.u32 %s69, 1
          %s145 = scalar_lea.sflag [#allocation3], %s144
          %s146 = sand.u32 %s69, 1
          %s147 = smul.addr %s146, 16
          %s148 = scalar_lea.vmem [#allocation6], %s147
          %s149 = sadd.s32 %s22, 4
          %s150 = smul.u32 2, %s20
          %s152 = ssub.s32 256, 256
          %153 = vsyncadd %s145, %s152
          %s154 = sadd.s32 %s21, %s150
          %s155 = smul.addr %s149, 2
          %s156 = sadd.s32 %s154, %s155
          %s157 = smul.addr %s156, 128
          %s158 = scalar_lea.hbm %s1, %s157
          %s159 = sshll.u32 %s148, 4
          %s160 = int_to_ptr.vmem [resolvable:$true] %s159
          %165 = dma.hbm_to_vmem [thread:$0]  %s158, 256, %s160, %s145, 128, 128, 8
        $region24: #{tpu_custom_call.1} parent=19 // pred_fallthru
          _
      $region20: #{tpu_custom_call.1} parent=5 // pred_fallthru
        _
      %p166 = scmp.le.s32.totalorder 1, %s13
      %p167 = scmp.lt.s32.totalorder %s13, 10
      %p168 = pnand %p166, %p167
      %p169 = pneg %p168
      // Predicated region
      $region25: #{tpu_custom_call.1} parent=5 // pred_check
        _
      $region26: #{tpu_custom_call.1} parent=5 // pred_check_branch
        %171 = sbr.rel (%p168) target = $region28
      $region27: #{tpu_custom_call.1} parent=5 // pred_region
        %s172 = ssub.s32 %s13, 1
        // Predicated region
        $region29: #{tpu_custom_call.1} parent=27 // pred_check
          %p173 = pneg %p53
        $region30: #{tpu_custom_call.1} parent=27 // pred_check_branch
          %175 = sbr.rel (%p173) target = $region32
        $region31: #{tpu_custom_call.1} parent=27 // pred_region
          %176 = dma.done [#allocation5], 16
        $region32: #{tpu_custom_call.1} parent=27 // pred_fallthru
          _
        %s177 = sand.u32 %s72, 1
        %s178 = scalar_lea.sflag [#allocation3], %s177
        %s179 = sand.u32 %s72, 1
        %s180 = smul.addr %s179, 16
        %s181 = scalar_lea.vmem [#allocation6], %s180
        // Predicated region
        $region33: #{tpu_custom_call.1} parent=27 // pred_check
          %p182 = pneg %p85
        $region34: #{tpu_custom_call.1} parent=27 // pred_check_branch
          %184 = sbr.rel (%p182) target = $region36
        $region35: #{tpu_custom_call.1} parent=27 // pred_region
          %185 = dma.done %s178, 256
        $region36: #{tpu_custom_call.1} parent=27 // pred_fallthru
          _
        %186 = sfence
        %p187 = pneg %p53
        %p188 = pneg %p50
        %s189 = sand.u32 %s72, 1
        %s190 = scalar_lea.sflag [#allocation3], %s189
        %s191 = sand.u32 %s72, 1
        %s192 = smul.addr %s191, 16
        %s193 = scalar_lea.vmem [#allocation6], %s192
        %p194 = pneg %p85
        %p195 = pneg %p82
        %p196 = pneg %p113
        %p197 = pneg %p110
        %s198 = sadd.s32 %s25, 4
        %s199 = smul.u32 2, %s23
        %s200 = smul.u32 2, %s23
        %p201 = scmp.eq.s32.totalorder %s25, 0
        // Predicated region
        $region37: #{tpu_custom_call.1} parent=27 // pred_check
          %p202 = pneg %p201
        $region38: #{tpu_custom_call.1} parent=27 // pred_check_branch
          %204 = sbr.rel (%p202) target = $region40
        $region39: #{tpu_custom_call.1} parent=27 // pred_region
          %s205 = sld [smem:[#allocation2]]
          %v206 = vld [vmem:[%s181] sm:$0xff]
          %v207 = vld [vmem:[%s181 + $0x8] sm:$0xff]
          %v208 = vstv %s205
          %v209 = vmul.f32 %v208, %v206
          %v210 = vmul.f32 %v208, %v207
          %vm211 = vcmask 261120
          %212 = vst.msk [vmem:[#allocation7] sm:$0xff] %vm211, %v209
          %213 = vst.msk [vmem:[#allocation7 + $0x8] sm:$0xff] %vm211, %v210
        $region40: #{tpu_custom_call.1} parent=27 // pred_fallthru
          _
        %p214 = scmp.gt.s32.totalorder %s25, 0
        // Predicated region
        $region41: #{tpu_custom_call.1} parent=27 // pred_check
          %p215 = pneg %p214
        $region42: #{tpu_custom_call.1} parent=27 // pred_check_branch
          %217 = sbr.rel (%p215) target = $region44
        $region43: #{tpu_custom_call.1} parent=27 // pred_region
          %v218 = vld [vmem:[#allocation7] sm:$0xff]
          %v219 = vld [vmem:[#allocation7 + $0x8] sm:$0xff]
          %s220 = sld [smem:[#allocation2 + %s25]]
          %v221 = vld [vmem:[%s181] sm:$0xff]
          %v222 = vld [vmem:[%s181 + $0x8] sm:$0xff]
          %v223 = vstv %s220
          %v224 = vmul.f32 %v223, %v221
          %v225 = vmul.f32 %v223, %v222
          %v226 = vadd.f32 %v218, %v224
          %v227 = vadd.f32 %v219, %v225
          %vm228 = vcmask 261120
          %229 = vst.msk [vmem:[#allocation7] sm:$0xff] %vm228, %v226
          %230 = vst.msk [vmem:[#allocation7 + $0x8] sm:$0xff] %vm228, %v227
        $region44: #{tpu_custom_call.1} parent=27 // pred_fallthru
          _
        // Predicated region
        $region45: #{tpu_custom_call.1} parent=27 // pred_check
          %p231 = pneg %p110
        $region46: #{tpu_custom_call.1} parent=27 // pred_check_branch
          %233 = sbr.rel (%p231) target = $region48
        $region47: #{tpu_custom_call.1} parent=27 // pred_region
          %s234 = smul.u32 2, %s23
          %s236 = ssub.s32 256, 256
          %237 = vsyncadd [#allocation4], %s236
          %s238 = sadd.s32 %s24, %s234
          %s239 = smul.addr %s238, 128
          %s240 = scalar_lea.hbm %s2, %s239
          %s241 = sshll.u32 [#allocation7], 4
          %s242 = int_to_ptr.vmem [resolvable:$true] %s241
          %247 = dma.vmem_to_hbm [thread:$0]  %s242, 256, %s240, [#allocation4], 128, 128, 8
        $region48: #{tpu_custom_call.1} parent=27 // pred_fallthru
          _
        // Predicated region
        $region49: #{tpu_custom_call.1} parent=27 // pred_check
          %p248 = pneg %p110
        $region50: #{tpu_custom_call.1} parent=27 // pred_check_branch
          %250 = sbr.rel (%p248) target = $region52
        $region51: #{tpu_custom_call.1} parent=27 // pred_region
          %251 = dma.done [#allocation4], 256
        $region52: #{tpu_custom_call.1} parent=27 // pred_fallthru
          _
      $region28: #{tpu_custom_call.1} parent=5 // pred_fallthru
        _
      %p252 = scmp.le.s32.totalorder 2, %s13
      // Predicated region
      $region53: #{tpu_custom_call.1} parent=5 // pred_check
        %p253 = pneg %p252
      $region54: #{tpu_custom_call.1} parent=5 // pred_check_branch
        %255 = sbr.rel (%p253) target = $region56
      $region55: #{tpu_custom_call.1} parent=5 // pred_region
        %s256 = ssub.s32 %s13, 2
      $region56: #{tpu_custom_call.1} parent=5 // pred_fallthru
        _
    $region6: #{tpu_custom_call.1} parent=1 // loop_footer
      %s17 = sadd.s32 1, %s13
    $region7: #{tpu_custom_call.1} parent=1 // loop_footer_branch
      %12 = sbr.rel target = $region3
    $region8: #{tpu_custom_call.1} parent=1 // loop_exit
      _
    %257 = vsyncpa [#allocation3], 1
    %s258 = scalar_lea.sflag [#allocation3], 1
    %259 = vsyncpa %s258, 1
    %260 = vsyncpa [#allocation4], 1
    %s261 = scalar_lea.sflag [#allocation4], 1
    %262 = vsyncpa %s261, 1
    %263 = vsyncpa [#allocation5], 1
    %s264 = scalar_lea.sflag [#allocation5], 1
    %265 = vsyncpa %s264, 1

</llo_original>
